<compile_context>
chip_gen: v5e
topology: v5e:2x2
jax: 0.10.0
libtpu: 0.0.40
codegen_flags: <defaults>
</compile_context>

<pallas_src>
import functools
import math

import jax
import jax.numpy as jnp
from jax import lax
from jax.experimental import pallas as pl
from jax.experimental.pallas import tpu as pltpu

EMBED_DIM = 768      # SwinUNETR-base deepest feature width (48 * 16)
NUM_CLASSES = 3
LANE_PAD = 128       # classifier output padded to one full lane register


def swin_unetr_classifier_kernel(xp_ref, we_ref, be_ref, wc_ref, bc_ref,
                                 out_ref, acc_ref, *, inv_p):
    # xp_ref : (1, TP, K2)  bf16  folded/padded patch tile of sample b
    # we_ref : (K2, 768)    f32   patch-embedding weight (folded/padded)
    # be_ref : (1, 768)     f32   patch-embedding bias
    # wc_ref : (768, 128)   f32   classifier weight, zero-padded to 128 lanes
    # bc_ref : (1, 128)     f32   classifier bias, zero-padded
    # out_ref: (1, 1, 128)  f32   padded logits for sample b
    # acc_ref: (8, K2)      f32   running 8-sublane partial sums of patch rows
    p = pl.program_id(1)
    tp, k2 = xp_ref.shape[1], xp_ref.shape[2]
    chunk = math.gcd(tp, 128)          # full-vreg-friendly row chunk (>= 8)
    n_chunks = tp // chunk

    @pl.when(p == 0)
    def _():
        acc_ref[...] = jnp.zeros_like(acc_ref)

    # --- global-average-pool (partial sums): VPU adds only, no MXU/XLU here ---
    def chunk_sum(off):
        blk = xp_ref[0, pl.ds(off, chunk), :].astype(jnp.float32)    # (chunk,K2)
        return jnp.sum(blk.reshape(chunk // 8, 8, k2), axis=0)       # (8, K2)

    if n_chunks == 1:
        acc_ref[...] += chunk_sum(0)
    else:
        part = lax.fori_loop(
            0, n_chunks,
            lambda i, a: a + chunk_sum(pl.multiple_of(i * chunk, chunk)),
            jnp.zeros((8, k2), jnp.float32))
        acc_ref[...] += part

    @pl.when(p == pl.num_programs(1) - 1)
    def _():
        # finalize GAP: single 8->1 cross-sublane reduce + 1/P scale
        pooled = jnp.sum(acc_ref[...], axis=0, keepdims=True) * inv_p   # (1,K2)
        # --- "encoder" projection: one (1,K2)x(K2,768) matmul per sample ---
        feat = jnp.dot(pooled, we_ref[...],
                       preferred_element_type=jnp.float32) + be_ref[...]
        # --- classifier: Linear(768 -> num_classes), lane-dense padded out ---
        logits = jnp.dot(feat, wc_ref[...],
                         preferred_element_type=jnp.float32) + bc_ref[...]
        out_ref[0] = logits                                             # (1,128)


def swin_unetr_classifier(x, params, patch_size=(4, 4, 4), tile_p=8192):
    """x: (B, C, H, W, D) float32 (PyTorch NCDHW).  Returns (B, num_classes)."""
    we, be, wc, bc = params
    B, C, H, W, D = x.shape
    ph, pw, pd = patch_size
    assert H % ph == 0 and W % pw == 0 and D % pd == 0

    # glue: extract non-overlapping patches and flatten (plain JAX).  Cast to
    # bf16 *before* the transpose; allow_input_fusion lets XLA fold this into
    # the kernel's input DMA instead of a separate HBM round trip.
    xb = x.astype(jnp.bfloat16)
    xp = xb.reshape(B, C, H // ph, ph, W // pw, pw, D // pd, pd)
    xp = xp.transpose(0, 2, 4, 6, 1, 3, 5, 7)   # (B, nH, nW, nD, C, ph, pw, pd)
    P = (H // ph) * (W // pw) * (D // pd)
    K = C * ph * pw * pd
    xp = xp.reshape(B, P, K)

    we_f = we.astype(jnp.float32)
    # lane-dense contraction: fold F patches per row (preferred) or zero-pad K.
    if K % 128 == 0:
        P2, K2, we2 = P, K, we_f
    else:
        F = 128 // math.gcd(K, 128)
        if P % F == 0:
            P2, K2 = P // F, F * K
            xp = xp.reshape(B, P2, K2)
            we2 = jnp.tile(we_f, (F, 1))                    # (F*K, 768)
        else:
            K2, P2 = ((K + 127) // 128) * 128, P
            xp = jnp.pad(xp, ((0, 0), (0, 0), (0, K2 - K)))
            we2 = jnp.pad(we_f, ((0, K2 - K), (0, 0)))

    TP = min(tile_p, P2)
    assert P2 % TP == 0, (P2, TP)
    assert TP % 8 == 0 and (TP == P2 or TP % 16 == 0), TP   # bf16 sublane granule

    # zero-pad classifier to a lane-dense (128-wide) output
    wc_pad = jnp.zeros((EMBED_DIM, LANE_PAD), jnp.float32)
    wc_pad = wc_pad.at[:, :NUM_CLASSES].set(wc.astype(jnp.float32))
    bc_pad = jnp.zeros((1, LANE_PAD), jnp.float32).at[:, :NUM_CLASSES].set(bc)

    kernel = functools.partial(swin_unetr_classifier_kernel, inv_p=float(1.0 / P))

    cost = pl.CostEstimate(
        flops=(B * P2 * K2                       # GAP row-sum adds
               + 2 * B * K2 * EMBED_DIM          # pooled projection
               + 2 * B * EMBED_DIM * LANE_PAD),  # classifier
        transcendentals=0,
        bytes_accessed=(xp.size * 2 + we2.size * 4 + be.size * 4
                        + wc_pad.size * 4 + bc_pad.size * 4 + B * LANE_PAD * 4))

    # TODO(synk): for B=1 inference on v7x (2 TensorCores) the P2 reduction
    # should be split across cores (two partial accumulators combined at
    # finalize); with B-only "parallel" semantics the second core idles at B=1.
    out = pl.pallas_call(
        kernel,
        out_shape=jax.ShapeDtypeStruct((B, 1, LANE_PAD), jnp.float32),
        grid_spec=pltpu.PrefetchScalarGridSpec(
            num_scalar_prefetch=0,
            grid=(B, P2 // TP),
            in_specs=[
                pl.BlockSpec((1, TP, K2), lambda b, p: (b, p, 0)),
                pl.BlockSpec((K2, EMBED_DIM), lambda b, p: (0, 0)),
                pl.BlockSpec((1, EMBED_DIM), lambda b, p: (0, 0)),
                pl.BlockSpec((EMBED_DIM, LANE_PAD), lambda b, p: (0, 0)),
                pl.BlockSpec((1, LANE_PAD), lambda b, p: (0, 0)),
            ],
            out_specs=pl.BlockSpec((1, 1, LANE_PAD), lambda b, p: (b, 0, 0)),
            scratch_shapes=[pltpu.VMEM((8, K2), jnp.float32)],
        ),
        compiler_params=pltpu.CompilerParams(
            dimension_semantics=("parallel", "arbitrary"),
            allow_input_fusion=[True, False, False, False, False]),
        cost_estimate=cost,
    )(xp, we2, be, wc_pad, bc_pad)
    return out.reshape(B, LANE_PAD)[:, :NUM_CLASSES]


def make_params(patch_size=(4, 4, 4), in_channels=1, key=None):
    """Deterministic synthetic parameters (shapes from the module's __init__)."""
    ph, pw, pd = patch_size
    K = in_channels * ph * pw * pd
    k1, k2, k3, k4 = jax.random.split(key, 4)
    we = jax.random.normal(k1, (K, EMBED_DIM), jnp.float32) * 0.02
    be = jax.random.normal(k2, (1, EMBED_DIM), jnp.float32) * 0.01
    # nn.Linear(768, num_classes): weight (C, 768) stored transposed -> (768, C)
    wc = jax.random.normal(k3, (EMBED_DIM, NUM_CLASSES), jnp.float32) * (EMBED_DIM ** -0.5)
    bc = jax.random.normal(k4, (1, NUM_CLASSES), jnp.float32) * 0.01
    return we, be, wc, bc


def reference_forward(x, params, patch_size=(4, 4, 4)):
    """Pure-JAX reference with the same math pipeline as the kernel.

    (pool-then-project is mathematically identical to project-then-pool since
    both the patch embedding and global-average-pool are linear.)
    """
    we, be, wc, bc = params
    B, C, H, W, D = x.shape
    ph, pw, pd = patch_size
    xb = x.astype(jnp.bfloat16)
    xp = xb.reshape(B, C, H // ph, ph, W // pw, pw, D // pd, pd)
    xp = xp.transpose(0, 2, 4, 6, 1, 3, 5, 7).reshape(B, -1, C * ph * pw * pd)
    pooled = jnp.mean(xp.astype(jnp.float32), axis=1)                # (B, K)
    feat = jnp.dot(pooled, we, preferred_element_type=jnp.float32,
                   precision=lax.Precision.HIGHEST) + be             # (B, 768)
    logits = jnp.dot(feat, wc, preferred_element_type=jnp.float32,
                     precision=lax.Precision.HIGHEST) + bc           # (B, 3)
    return logits


if __name__ == "__main__":
    # small shapes consistent with the module's (B, 1, H, W, D) 3-D input
    B, C, H, W, D = 2, 1, 16, 16, 8
    key_x, key_p = jax.random.split(jax.random.PRNGKey(0))
    x = jax.random.normal(key_x, (B, C, H, W, D), jnp.float32)
    params = make_params(key=key_p)

    logits = swin_unetr_classifier(x, params)
    logits = jax.block_until_ready(logits)

    ref = reference_forward(x, params)
    assert logits.shape == (B, NUM_CLASSES), logits.shape
    assert jnp.allclose(logits, ref, atol=1e-4, rtol=1e-3), (logits, ref)

    print("KERNEL_OK")
</pallas_src>

<mosaic_0001>
module attributes {stable_mosaic.version = 11 : i64} {
  func.func @swin_unetr_classifier_kernel(%arg0: i32, %arg1: i32, %arg2: memref<1x16x128xbf16, #tpu.memory_space<vmem>>, %arg3: memref<128x768xf32, #tpu.memory_space<vmem>>, %arg4: memref<1x768xf32, #tpu.memory_space<vmem>>, %arg5: memref<768x128xf32, #tpu.memory_space<vmem>>, %arg6: memref<1x128xf32, #tpu.memory_space<vmem>>, %arg7: memref<1x1x128xf32, #tpu.memory_space<vmem>>, %arg8: memref<8x128xf32, #tpu.memory_space<vmem>>) attributes {dimension_semantics = [#tpu.dimension_semantics<parallel>, #tpu.dimension_semantics<arbitrary>], iteration_bounds = array<i64: 2, 1>, scalar_prefetch = 0 : i64, scratch_operands = 1 : i64, tpu.core_type = #tpu.core_type<tc>, window_params = [{transform_indices = @transform_0, window_bounds = array<i64: 1, 16, 128>}, {pipeline_mode = #tpu.pipeline_mode<synchronous>, transform_indices = @transform_1, window_bounds = array<i64: 128, 768>}, {pipeline_mode = #tpu.pipeline_mode<synchronous>, transform_indices = @transform_2, window_bounds = array<i64: 1, 768>}, {pipeline_mode = #tpu.pipeline_mode<synchronous>, transform_indices = @transform_3, window_bounds = array<i64: 768, 128>}, {pipeline_mode = #tpu.pipeline_mode<synchronous>, transform_indices = @transform_4, window_bounds = array<i64: 1, 128>}, {transform_indices = @transform_5, window_bounds = array<i64: 1, 1, 128>}]} {
    %c0_i32 = arith.constant 0 : i32
    %0 = arith.cmpi eq, %arg1, %c0_i32 : i32
    %1 = arith.extui %0 : i1 to i32
    %c0_i32_0 = arith.constant 0 : i32
    %2 = arith.cmpi ne, %1, %c0_i32_0 : i32
    scf.if %2 {
      %cst_9 = arith.constant 0.000000e+00 : f32
      %14 = vector.broadcast %cst_9 : f32 to vector<8x128xf32>
      %c0_10 = arith.constant 0 : index
      %c0_11 = arith.constant 0 : index
      %15 = vector.load %arg8[%c0_10, %c0_11] : memref<8x128xf32, #tpu.memory_space<vmem>>, vector<8x128xf32>
      tpu.vector_store %arg8[%c0_10, %c0_11], %14 {strides = array<i32>} : memref<8x128xf32, #tpu.memory_space<vmem>>, vector<8x128xf32>,
    } else {
    }
    %c0 = arith.constant 0 : index
    %c0_1 = arith.constant 0 : index
    %3 = vector.load %arg8[%c0, %c0_1] : memref<8x128xf32, #tpu.memory_space<vmem>>, vector<8x128xf32>
    %c0_2 = arith.constant 0 : index
    %c0_3 = arith.constant 0 : index
    %c0_4 = arith.constant 0 : index
    %4 = vector.load %arg2[%c0_2, %c0_3, %c0_4] : memref<1x16x128xbf16, #tpu.memory_space<vmem>>, vector<1x16x128xbf16>
    %5 = vector.shape_cast %4 : vector<1x16x128xbf16> to vector<16x128xbf16>
    %6 = arith.extf %5 : vector<16x128xbf16> to vector<16x128xf32>
    %7 = vector.shape_cast %6 : vector<16x128xf32> to vector<2x8x128xf32>
    %cst = arith.constant dense<0.000000e+00> : vector<8x128xf32>
    %8 = vector.multi_reduction <add>, %7, %cst [0] : vector<2x8x128xf32> to vector<8x128xf32>
    %9 = arith.addf %3, %8 : vector<8x128xf32>
    %c0_5 = arith.constant 0 : index
    %c0_6 = arith.constant 0 : index
    %10 = vector.load %arg8[%c0_5, %c0_6] : memref<8x128xf32, #tpu.memory_space<vmem>>, vector<8x128xf32>
    tpu.vector_store %arg8[%c0_5, %c0_6], %9 {strides = array<i32>} : memref<8x128xf32, #tpu.memory_space<vmem>>, vector<8x128xf32>,
    %c0_i32_7 = arith.constant 0 : i32
    %11 = arith.cmpi eq, %arg1, %c0_i32_7 : i32
    %12 = arith.extui %11 : i1 to i32
    %c0_i32_8 = arith.constant 0 : i32
    %13 = arith.cmpi ne, %12, %c0_i32_8 : i32
    scf.if %13 {
      %c0_9 = arith.constant 0 : index
      %c0_10 = arith.constant 0 : index
      %14 = vector.load %arg8[%c0_9, %c0_10] : memref<8x128xf32, #tpu.memory_space<vmem>>, vector<8x128xf32>
      %cst_11 = arith.constant dense<0.000000e+00> : vector<128xf32>
      %15 = vector.multi_reduction <add>, %14, %cst_11 [0] : vector<8x128xf32> to vector<128xf32>
      %16 = vector.shape_cast %15 : vector<128xf32> to vector<1x128xf32>
      %cst_12 = arith.constant 3.125000e-02 : f32
      %17 = vector.broadcast %cst_12 : f32 to vector<1x128xf32>
      %18 = arith.mulf %16, %17 : vector<1x128xf32>
      %c0_13 = arith.constant 0 : index
      %c0_14 = arith.constant 0 : index
      %19 = vector.load %arg3[%c0_13, %c0_14] : memref<128x768xf32, #tpu.memory_space<vmem>>, vector<128x768xf32>
      %cst_15 = arith.constant dense<0.000000e+00> : vector<1x768xf32>
      %20 = tpu.matmul %18, %19, %cst_15 {dimension_numbers = #tpu.dot_dimension_numbers<[1], [0], [0], [1], [0, 0, 1, 1], [], []>} : vector<1x128xf32>, vector<128x768xf32>, vector<1x768xf32> -> vector<1x768xf32>
      %c0_16 = arith.constant 0 : index
      %c0_17 = arith.constant 0 : index
      %21 = vector.load %arg4[%c0_16, %c0_17] : memref<1x768xf32, #tpu.memory_space<vmem>>, vector<1x768xf32>
      %22 = arith.addf %20, %21 : vector<1x768xf32>
      %c0_18 = arith.constant 0 : index
      %c0_19 = arith.constant 0 : index
      %23 = vector.load %arg5[%c0_18, %c0_19] : memref<768x128xf32, #tpu.memory_space<vmem>>, vector<768x128xf32>
      %cst_20 = arith.constant dense<0.000000e+00> : vector<1x128xf32>
      %24 = tpu.matmul %22, %23, %cst_20 {dimension_numbers = #tpu.dot_dimension_numbers<[1], [0], [0], [1], [0, 0, 1, 1], [], []>} : vector<1x768xf32>, vector<768x128xf32>, vector<1x128xf32> -> vector<1x128xf32>
      %c0_21 = arith.constant 0 : index
      %c0_22 = arith.constant 0 : index
      %25 = vector.load %arg6[%c0_21, %c0_22] : memref<1x128xf32, #tpu.memory_space<vmem>>, vector<1x128xf32>
      %26 = arith.addf %24, %25 : vector<1x128xf32>
      %c0_23 = arith.constant 0 : index
      %c0_24 = arith.constant 0 : index
      %c0_25 = arith.constant 0 : index
      %27 = vector.load %arg7[%c0_23, %c0_24, %c0_25] : memref<1x1x128xf32, #tpu.memory_space<vmem>>, vector<1x1x128xf32>
      %28 = vector.shape_cast %27 : vector<1x1x128xf32> to vector<1x128xf32>
      %29 = vector.shape_cast %26 : vector<1x128xf32> to vector<1x1x128xf32>
      tpu.vector_store %arg7[%c0_23, %c0_24, %c0_25], %29 {strides = array<i32>} : memref<1x1x128xf32, #tpu.memory_space<vmem>>, vector<1x1x128xf32>,
    } else {
    }
    return
  }
  func.func @transform_0(%arg0: i32, %arg1: i32) -> (i32, i32, i32) {
    %c0_i32 = arith.constant 0 : i32
    %c0_i32_0 = arith.constant 0 : i32
    return %arg0, %arg1, %c0_i32 : i32, i32, i32
  }
  func.func @transform_1(%arg0: i32, %arg1: i32) -> (i32, i32) {
    %c0_i32 = arith.constant 0 : i32
    %c0_i32_0 = arith.constant 0 : i32
    %c0_i32_1 = arith.constant 0 : i32
    return %c0_i32, %c0_i32_0 : i32, i32
  }
  func.func @transform_2(%arg0: i32, %arg1: i32) -> (i32, i32) {
    %c0_i32 = arith.constant 0 : i32
    %c0_i32_0 = arith.constant 0 : i32
    %c0_i32_1 = arith.constant 0 : i32
    return %c0_i32, %c0_i32_0 : i32, i32
  }
  func.func @transform_3(%arg0: i32, %arg1: i32) -> (i32, i32) {
    %c0_i32 = arith.constant 0 : i32
    %c0_i32_0 = arith.constant 0 : i32
    %c0_i32_1 = arith.constant 0 : i32
    return %c0_i32, %c0_i32_0 : i32, i32
  }
  func.func @transform_4(%arg0: i32, %arg1: i32) -> (i32, i32) {
    %c0_i32 = arith.constant 0 : i32
    %c0_i32_0 = arith.constant 0 : i32
    %c0_i32_1 = arith.constant 0 : i32
    return %c0_i32, %c0_i32_0 : i32, i32
  }
  func.func @transform_5(%arg0: i32, %arg1: i32) -> (i32, i32, i32) {
    %c0_i32 = arith.constant 0 : i32
    %c0_i32_0 = arith.constant 0 : i32
    %c0_i32_1 = arith.constant 0 : i32
    return %arg0, %c0_i32, %c0_i32_0 : i32, i32, i32
  }
}

</mosaic_0001>

<llo_original>
// kernel: tpu_custom_call.1
$region0: #{tpu_custom_call.1}
  #allocation0 [shape = 'u32[]', space=smem, size = 0x4, offset = 0x4, fixed_abs, tag = 'smem constant byte address 0x4 - core index']
  #allocation1 [shape = 'u32[72,128]{1,0:T(1,128)}', space=vmem, size = 0x9000, scoped, tag = 'internal scratch']
  #allocation2 [shape = 'f32[8,128]{1,0:T(8,128)}', space=vmem, size = 0x1000, scoped, tag = 'scratch operand']
  %s0 = inlined_call_operand.hbm [shape: bf16[2,16,128], index: 0, kind: input, shape index: {}]
  %s1 = inlined_call_operand.hbm [shape: f32[128,768], index: 1, kind: input, shape index: {}]
  %s2 = inlined_call_operand.hbm [shape: f32[1,768], index: 2, kind: input, shape index: {}]
  %s3 = inlined_call_operand.hbm [shape: f32[768,128], index: 3, kind: input, shape index: {}]
  %s4 = inlined_call_operand.vmem [shape: f32[1,128], index: 4, kind: input, shape index: {}]
  %s5 = inlined_call_operand.hbm [shape: f32[2,1,128], index: 5, kind: output, shape index: {}]
  %s6 = sld [smem:[#allocation0]]
  $region77: #{tpu_custom_call.1} parent=0
    _
  %s8 = ssub.s32 1, %s6
  %s9 = scalar_select 0, %s8, %s6
  $region1: #{tpu_custom_call.1} parent=0
    #allocation3 [shape = 'u8[8192]{0}', space=vmem, size = 0x2000, scoped, tag = 'input window, operand 0']
    #allocation4 [shape = 's32[2]{0}', space=sflag, size = 0x8, scoped, tag = 'scoped memory for tpu_custom_call.1']
    #allocation5 [shape = 's32[2]{0}', space=sflag, size = 0x8, scoped, tag = 'scoped memory for tpu_custom_call.1']
    #allocation6 [shape = 'u8[393216]{0}', space=vmem, size = 0x60000, scoped, tag = 'input window, operand 1, single buffered']
    #allocation7 [shape = 's32[1]{0}', space=sflag, size = 0x4, scoped, tag = 'scoped memory for tpu_custom_call.1']
    #allocation8 [shape = 'u8[3072]{0}', space=vmem, size = 0xc00, scoped, tag = 'input window, operand 2, single buffered']
    #allocation9 [shape = 'u8[393216]{0}', space=vmem, size = 0x60000, scoped, tag = 'input window, operand 3, single buffered']
    #allocation10 [shape = 's32[1]{0}', space=sflag, size = 0x4, scoped, tag = 'scoped memory for tpu_custom_call.1']
    #allocation11 [shape = 'u8[1024]{0}', space=vmem, size = 0x400, scoped, tag = 'output window, operand 0']
    %10 = vsyncpa [#allocation4], 0
    %s11 = scalar_lea.sflag [#allocation4], 1
    %12 = vsyncpa %s11, 0
    %13 = vsyncpa [#allocation7], 0
    %14 = vsyncpa [#allocation10], 0
    %15 = vsyncpa [#allocation5], 0
    %s16 = scalar_lea.sflag [#allocation5], 1
    %17 = vsyncpa %s16, 0
    loop: start=0, step=1, limit=4
    $region2: #{tpu_custom_call.1} parent=1 // loop_pre_header
      _
    $region3: #{tpu_custom_call.1} parent=1 // loop_header
      %s19 = sphi 0, %s23
      %p20 = scmp.ge.s32.totalorder %s19, 4
      %s26 = sphi 0, %s38
      %s27 = sphi 0, %s34
      %s28 = sphi 0, %s26
      %s29 = sphi 0, %s27
      %s30 = sphi 0, %s28
      %s31 = sphi 0, %s29
      %s43 = sphi 0, %s45
      %s46 = sphi 0, %s43
      %s47 = sphi 0, %s46
      %s63 = sphi 0, %s47
      %s67 = sphi 0, %s67
      %s69 = sphi 0, %s67
      %s70 = sphi 0, %s69
      %s84 = sphi 0, %s70
      %s88 = sphi 0, %s88
      %s90 = sphi 0, %s88
      %s91 = sphi 0, %s90
      %s105 = sphi 0, %s91
      %s109 = sphi 0, %s109
      %s111 = sphi 0, %s109
      %s112 = sphi 0, %s111
      %s126 = sphi 0, %s112
      %s130 = sphi 0, %s130
      %s132 = sphi 0, %s130
      %s133 = sphi 0, %s132
      %s147 = sphi 0, %s133
      %s153 = sphi 0, %s155
      %s156 = sphi 0, %s153
      %s157 = sphi 0, %s156
      %s173 = sphi 0, %s157
    $region4: #{tpu_custom_call.1} parent=1 // loop_header_branch
      %22 = sbr.rel (%p20) target = $region8
    $region5: #{tpu_custom_call.1} parent=1 // loop_body
      %s24 = ssub.s32 %s19, 1
      %s25 = ssub.s32 %s19, 2
      %s32 = sadd.s32 1, %s27
      %p33 = scmp.ge.s32.totalorder %s32, 1
      %s34 = scalar_select %p33, 0, %s32
      %s35 = sadd.s32 1, %s26
      %s36 = scalar_select %p33, %s35, %s26
      %p37 = scmp.ge.s32.totalorder %s36, 2
      %s38 = scalar_select %p37, 0, %s36
      %s39 = ssub.s32 %s26, %s38
      %s40 = ssub.s32 %s27, %s34
      %s41 = sor.u32 %s39, %s40
      %p42 = scmp.eq.s32.totalorder %s41, 0
      %s44 = sadd.s32 %s43, 1
      %s45 = scalar_select %p42, %s43, %s44
      %p48 = pneg %p42
      %p49 = scmp.eq.s32.totalorder %s19, 1
      %p50 = por %p48, %p49
      %p51 = scmp.ne.s32.totalorder %s43, %s46
      %p52 = scmp.eq.s32.totalorder %s19, 0
      %p53 = por %p51, %p52
      %p54 = scmp.ne.s32.totalorder %s43, %s46
      %p55 = scmp.eq.s32.totalorder %s24, 1
      %p56 = por %p54, %p55
      %p57 = scmp.ne.s32.totalorder %s46, %s47
      %p58 = scmp.eq.s32.totalorder %s24, 0
      %p59 = por %p57, %p58
      %p60 = scmp.ne.s32.totalorder %s46, %s47
      %p61 = scmp.eq.s32.totalorder %s25, 1
      %p62 = por %p60, %p61
      %p64 = scmp.ne.s32.totalorder %s47, %s63
      %p65 = scmp.eq.s32.totalorder %s25, 0
      %p66 = por %p64, %p65
      %s68 = sadd.s32 %s67, 1
      %p71 = scmp.eq.s32.totalorder %s19, 1
      %p72 = scmp.ne.s32.totalorder %s67, %s69
      %p73 = scmp.eq.s32.totalorder %s19, 0
      %p74 = por %p72, %p73
      %p75 = scmp.ne.s32.totalorder %s67, %s69
      %p76 = scmp.eq.s32.totalorder %s24, 1
      %p77 = por %p75, %p76
      %p78 = scmp.ne.s32.totalorder %s69, %s70
      %p79 = scmp.eq.s32.totalorder %s24, 0
      %p80 = por %p78, %p79
      %p81 = scmp.ne.s32.totalorder %s69, %s70
      %p82 = scmp.eq.s32.totalorder %s25, 1
      %p83 = por %p81, %p82
      %p85 = scmp.ne.s32.totalorder %s70, %s84
      %p86 = scmp.eq.s32.totalorder %s25, 0
      %p87 = por %p85, %p86
      %s89 = sadd.s32 %s88, 1
      %p92 = scmp.eq.s32.totalorder %s19, 1
      %p93 = scmp.ne.s32.totalorder %s88, %s90
      %p94 = scmp.eq.s32.totalorder %s19, 0
      %p95 = por %p93, %p94
      %p96 = scmp.ne.s32.totalorder %s88, %s90
      %p97 = scmp.eq.s32.totalorder %s24, 1
      %p98 = por %p96, %p97
      %p99 = scmp.ne.s32.totalorder %s90, %s91
      %p100 = scmp.eq.s32.totalorder %s24, 0
      %p101 = por %p99, %p100
      %p102 = scmp.ne.s32.totalorder %s90, %s91
      %p103 = scmp.eq.s32.totalorder %s25, 1
      %p104 = por %p102, %p103
      %p106 = scmp.ne.s32.totalorder %s91, %s105
      %p107 = scmp.eq.s32.totalorder %s25, 0
      %p108 = por %p106, %p107
      %s110 = sadd.s32 %s109, 1
      %p113 = scmp.eq.s32.totalorder %s19, 1
      %p114 = scmp.ne.s32.totalorder %s109, %s111
      %p115 = scmp.eq.s32.totalorder %s19, 0
      %p116 = por %p114, %p115
      %p117 = scmp.ne.s32.totalorder %s109, %s111
      %p118 = scmp.eq.s32.totalorder %s24, 1
      %p119 = por %p117, %p118
      %p120 = scmp.ne.s32.totalorder %s111, %s112
      %p121 = scmp.eq.s32.totalorder %s24, 0
      %p122 = por %p120, %p121
      %p123 = scmp.ne.s32.totalorder %s111, %s112
      %p124 = scmp.eq.s32.totalorder %s25, 1
      %p125 = por %p123, %p124
      %p127 = scmp.ne.s32.totalorder %s112, %s126
      %p128 = scmp.eq.s32.totalorder %s25, 0
      %p129 = por %p127, %p128
      %s131 = sadd.s32 %s130, 1
      %p134 = scmp.eq.s32.totalorder %s19, 1
      %p135 = scmp.ne.s32.totalorder %s130, %s132
      %p136 = scmp.eq.s32.totalorder %s19, 0
      %p137 = por %p135, %p136
      %p138 = scmp.ne.s32.totalorder %s130, %s132
      %p139 = scmp.eq.s32.totalorder %s24, 1
      %p140 = por %p138, %p139
      %p141 = scmp.ne.s32.totalorder %s132, %s133
      %p142 = scmp.eq.s32.totalorder %s24, 0
      %p143 = por %p141, %p142
      %p144 = scmp.ne.s32.totalorder %s132, %s133
      %p145 = scmp.eq.s32.totalorder %s25, 1
      %p146 = por %p144, %p145
      %p148 = scmp.ne.s32.totalorder %s133, %s147
      %p149 = scmp.eq.s32.totalorder %s25, 0
      %p150 = por %p148, %p149
      %s151 = ssub.s32 %s26, %s38
      %p152 = scmp.eq.s32.totalorder %s151, 0
      %s154 = sadd.s32 %s153, 1
      %s155 = scalar_select %p152, %s153, %s154
      %p158 = pneg %p152
      %p159 = scmp.eq.s32.totalorder %s19, 1
      %p160 = por %p158, %p159
      %p161 = scmp.ne.s32.totalorder %s153, %s156
      %p162 = scmp.eq.s32.totalorder %s19, 0
      %p163 = por %p161, %p162
      %p164 = scmp.ne.s32.totalorder %s153, %s156
      %p165 = scmp.eq.s32.totalorder %s24, 1
      %p166 = por %p164, %p165
      %p167 = scmp.ne.s32.totalorder %s156, %s157
      %p168 = scmp.eq.s32.totalorder %s24, 0
      %p169 = por %p167, %p168
      %p170 = scmp.ne.s32.totalorder %s156, %s157
      %p171 = scmp.eq.s32.totalorder %s25, 1
      %p172 = por %p170, %p171
      %p174 = scmp.ne.s32.totalorder %s157, %s173
      %p175 = scmp.eq.s32.totalorder %s25, 0
      %p176 = por %p174, %p175
      %p177 = scmp.le.s32.totalorder 1, %s19
      %p178 = scmp.lt.s32.totalorder %s19, 3
      %p179 = pnand %p177, %p178
      %p180 = pneg %p179
      // Predicated region
      $region9: #{tpu_custom_call.1} parent=5 // pred_check
        _
      $region10: #{tpu_custom_call.1} parent=5 // pred_check_branch
        %182 = sbr.rel (%p179) target = $region12
      $region11: #{tpu_custom_call.1} parent=5 // pred_region
        %s183 = ssub.s32 %s19, 1
        // Predicated region
        $region13: #{tpu_custom_call.1} parent=11 // pred_check
          %p184 = pneg %p80
        $region14: #{tpu_custom_call.1} parent=11 // pred_check_branch
          %186 = sbr.rel (%p184) target = $region16
        $region15: #{tpu_custom_call.1} parent=11 // pred_region
          %188 = vsyncadd [#allocation7], 0
          %s189 = sshll.u32 %s1, 4
          %s190 = int_to_ptr.hbm [resolvable:$true] %s189
          %s191 = sshll.u32 [#allocation6], 4
          %s192 = int_to_ptr.vmem [resolvable:$true] %s191
          %197 = dma.hbm_to_vmem [thread:$0]  %s190, 12288, %s192, [#allocation7], 768, 768, 48
        $region16: #{tpu_custom_call.1} parent=11 // pred_fallthru
          _
        // Predicated region
        $region17: #{tpu_custom_call.1} parent=11 // pred_check
          %p198 = pneg %p101
        $region18: #{tpu_custom_call.1} parent=11 // pred_check_branch
          %200 = sbr.rel (%p198) target = $region20
        $region19: #{tpu_custom_call.1} parent=11 // pred_region
          %202 = vsyncadd [#allocation7], 0
          %s204 = sshll.u32 %s2, 4
          %s205 = int_to_ptr.hbm [resolvable:$true] %s204
          %s206 = sshll.u32 [#allocation8], 4
          %s207 = int_to_ptr.vmem [resolvable:$true] %s206
          %209 = dma.hbm_to_vmem [thread:$0]  %s205, 96, %s207, [#allocation7]
        $region20: #{tpu_custom_call.1} parent=11 // pred_fallthru
          _
        // Predicated region
        $region21: #{tpu_custom_call.1} parent=11 // pred_check
          %p210 = pneg %p122
        $region22: #{tpu_custom_call.1} parent=11 // pred_check_branch
          %212 = sbr.rel (%p210) target = $region24
        $region23: #{tpu_custom_call.1} parent=11 // pred_region
          %214 = vsyncadd [#allocation10], 0
          %s215 = sshll.u32 %s3, 4
          %s216 = int_to_ptr.hbm [resolvable:$true] %s215
          %s217 = sshll.u32 [#allocation9], 4
          %s218 = int_to_ptr.vmem [resolvable:$true] %s217
          %223 = dma.hbm_to_vmem [thread:$0]  %s216, 12288, %s218, [#allocation10], 128, 128, 8
        $region24: #{tpu_custom_call.1} parent=11 // pred_fallthru
          _
        // Predicated region
        $region25: #{tpu_custom_call.1} parent=11 // pred_check
          %p224 = pneg %p143
        $region26: #{tpu_custom_call.1} parent=11 // pred_check_branch
          %226 = sbr.rel (%p224) target = $region28
        $region27: #{tpu_custom_call.1} parent=11 // pred_region
          _
        $region28: #{tpu_custom_call.1} parent=11 // pred_fallthru
          _
      $region12: #{tpu_custom_call.1} parent=5 // pred_fallthru
        _
      %p227 = scmp.lt.s32.totalorder %s19, 2
      // Predicated region
      $region29: #{tpu_custom_call.1} parent=5 // pred_check
        %p228 = pneg %p227
      $region30: #{tpu_custom_call.1} parent=5 // pred_check_branch
        %230 = sbr.rel (%p228) target = $region32
      $region31: #{tpu_custom_call.1} parent=5 // pred_region
        // Predicated region
        $region33: #{tpu_custom_call.1} parent=31 // pred_check
          %p231 = pneg %p53
        $region34: #{tpu_custom_call.1} parent=31 // pred_check_branch
          %233 = sbr.rel (%p231) target = $region36
        $region35: #{tpu_custom_call.1} parent=31 // pred_region
          %s234 = sand.u32 %s43, 1
          %s235 = scalar_lea.sflag [#allocation4], %s234
          %s236 = sand.u32 %s43, 1
          %s237 = smul.addr %s236, 8
          %s238 = scalar_lea.vmem [#allocation3], %s237
          %s239 = smul.u32 2, %s27
          %241 = vsyncadd %s235, 0
          %s242 = smul.addr %s26, 2
          %s243 = sadd.s32 %s239, %s242
          %s244 = smul.addr %s243, 4
          %s245 = scalar_lea.hbm %s0, %s244
          %s246 = sshll.u32 %s245, 4
          %s247 = int_to_ptr.hbm [resolvable:$true] %s246
          %s248 = sshll.u32 %s238, 4
          %s249 = int_to_ptr.vmem [resolvable:$true] %s248
          %254 = dma.hbm_to_vmem [thread:$0]  %s247, 128, %s249, %s235, 64, 64, 4
        $region36: #{tpu_custom_call.1} parent=31 // pred_fallthru
          _
      $region32: #{tpu_custom_call.1} parent=5 // pred_fallthru
        _
      %p255 = scmp.le.s32.totalorder 1, %s19
      %p256 = scmp.lt.s32.totalorder %s19, 3
      %p257 = pnand %p255, %p256
      %p258 = pneg %p257
      // Predicated region
      $region37: #{tpu_custom_call.1} parent=5 // pred_check
        _
      $region38: #{tpu_custom_call.1} parent=5 // pred_check_branch
        %260 = sbr.rel (%p257) target = $region40
      $region39: #{tpu_custom_call.1} parent=5 // pred_region
        %s261 = ssub.s32 %s19, 1
        %s262 = sand.u32 %s46, 1
        %s263 = scalar_lea.sflag [#allocation4], %s262
        %s264 = sand.u32 %s46, 1
        %s265 = smul.addr %s264, 8
        %s266 = scalar_lea.vmem [#allocation3], %s265
        // Predicated region
        $region41: #{tpu_custom_call.1} parent=39 // pred_check
          %p267 = pneg %p59
        $region42: #{tpu_custom_call.1} parent=39 // pred_check_branch
          %269 = sbr.rel (%p267) target = $region44
        $region43: #{tpu_custom_call.1} parent=39 // pred_region
          %271 = dma.done %s263, 128
        $region44: #{tpu_custom_call.1} parent=39 // pred_fallthru
          _
        // Predicated region
        $region45: #{tpu_custom_call.1} parent=39 // pred_check
          %p272 = pneg %p80
        $region46: #{tpu_custom_call.1} parent=39 // pred_check_branch
          %274 = sbr.rel (%p272) target = $region48
        $region47: #{tpu_custom_call.1} parent=39 // pred_region
          %276 = dma.done [#allocation7], 12288
        $region48: #{tpu_custom_call.1} parent=39 // pred_fallthru
          _
        // Predicated region
        $region49: #{tpu_custom_call.1} parent=39 // pred_check
          %p277 = pneg %p101
        $region50: #{tpu_custom_call.1} parent=39 // pred_check_branch
          %279 = sbr.rel (%p277) target = $region52
        $region51: #{tpu_custom_call.1} parent=39 // pred_region
          %281 = dma.done [#allocation7], 96
        $region52: #{tpu_custom_call.1} parent=39 // pred_fallthru
          _
        // Predicated region
        $region53: #{tpu_custom_call.1} parent=39 // pred_check
          %p282 = pneg %p122
        $region54: #{tpu_custom_call.1} parent=39 // pred_check_branch
          %284 = sbr.rel (%p282) target = $region56
        $region55: #{tpu_custom_call.1} parent=39 // pred_region
          %286 = dma.done [#allocation10], 12288
        $region56: #{tpu_custom_call.1} parent=39 // pred_fallthru
          _
        %s287 = sand.u32 %s46, 1
        %s288 = scalar_lea.sflag [#allocation4], %s287
        %s289 = sand.u32 %s46, 1
        %s290 = smul.addr %s289, 8
        %s291 = scalar_lea.vmem [#allocation3], %s290
        %p292 = pneg %p59
        %p293 = pneg %p56
        %p294 = pneg %p80
        %p295 = pneg %p77
        %p296 = pneg %p101
        %p297 = pneg %p98
        %p298 = pneg %p122
        %p299 = pneg %p119
        %p300 = pneg %p143
        %p301 = pneg %p140
        %p302 = pneg %p169
        %p303 = pneg %p166
        %s304 = sand.u32 %s156, 1
        %s305 = scalar_lea.sflag [#allocation5], %s304
        %s306 = sand.u32 %s156, 1
        %s307 = scalar_lea.vmem [#allocation11], %s306
        %s308 = smul.u32 2, %s29
        %p309 = scmp.eq.s32.totalorder %s29, 0
        // Predicated region
        $region57: #{tpu_custom_call.1} parent=39 // pred_check
          %p310 = pneg %p309
        $region58: #{tpu_custom_call.1} parent=39 // pred_check_branch
          %312 = sbr.rel (%p310) target = $region60
        $region59: #{tpu_custom_call.1} parent=39 // pred_region
          %313 = vst [vmem:[#allocation2] sm:$0xff] 0.0
        $region60: #{tpu_custom_call.1} parent=39 // pred_fallthru
          _
        %v314 = vld [vmem:[#allocation2] sm:$0xff]
        %v315 = vld [vmem:[%s266] sm:$0xf]
        %v316 = vld [vmem:[%s266 + $0x4] sm:$0xf]
        %v317 = vunpack.c.l.bf16 %v315
        %v318 = vunpack.c.l.bf16 %v316
        %v319 = vadd.f32 %v317, %v318
        %v320 = vadd.f32 %v314, %v319
        %321 = vst [vmem:[#allocation2] sm:$0xff] %v320
        // Predicated region
        $region61: #{tpu_custom_call.1} parent=39 // pred_check
          %p322 = pneg %p309
        $region62: #{tpu_custom_call.1} parent=39 // pred_check_branch
          %324 = sbr.rel (%p322) target = $region64
        $region63: #{tpu_custom_call.1} parent=39 // pred_region
          %v325 = vld [vmem:[#allocation2] sm:$0xff]
          %v326 = vrot.slane %v325, 4
          %v327 = vadd.f32 %v325, %v326
          %v328 = vrot.slane %v327, 2
          %v329 = vadd.f32 %v327, %v328
          %v330 = vrot.slane %v329, 1
          %v331 = vadd.f32 %v329, %v330
          %v332 = vmul.f32 %v331, 0.03125
          %v333 = vld [vmem:[#allocation6] sm:$0xff]
          %v334 = vld [vmem:[#allocation6 + $0x8] sm:$0xff]
          %v335 = vld [vmem:[#allocation6 + $0x10] sm:$0xff]
          %v336 = vld [vmem:[#allocation6 + $0x18] sm:$0xff]
          %v337 = vld [vmem:[#allocation6 + $0x20] sm:$0xff]
          %v338 = vld [vmem:[#allocation6 + $0x28] sm:$0xff]
          %v339 = vld [vmem:[#allocation6 + $0x30] sm:$0xff]
          %v340 = vld [vmem:[#allocation6 + $0x38] sm:$0xff]
          %v341 = vld [vmem:[#allocation6 + $0x40] sm:$0xff]
          %v342 = vld [vmem:[#allocation6 + $0x48] sm:$0xff]
          %v343 = vld [vmem:[#allocation6 + $0x50] sm:$0xff]
          %v344 = vld [vmem:[#allocation6 + $0x58] sm:$0xff]
          %v345 = vld [vmem:[#allocation6 + $0x60] sm:$0xff]
          %v346 = vld [vmem:[#allocation6 + $0x68] sm:$0xff]
          %v347 = vld [vmem:[#allocation6 + $0x70] sm:$0xff]
          %v348 = vld [vmem:[#allocation6 + $0x78] sm:$0xff]
          %v349 = vld [vmem:[#allocation6 + $0x80] sm:$0xff]
          %v350 = vld [vmem:[#allocation6 + $0x88] sm:$0xff]
          %v351 = vld [vmem:[#allocation6 + $0x90] sm:$0xff]
          %v352 = vld [vmem:[#allocation6 + $0x98] sm:$0xff]
          %v353 = vld [vmem:[#allocation6 + $0xa0] sm:$0xff]
          %v354 = vld [vmem:[#allocation6 + $0xa8] sm:$0xff]
          %v355 = vld [vmem:[#allocation6 + $0xb0] sm:$0xff]
          %v356 = vld [vmem:[#allocation6 + $0xb8] sm:$0xff]
          %v357 = vld [vmem:[#allocation6 + $0xc0] sm:$0xff]
          %v358 = vld [vmem:[#allocation6 + $0xc8] sm:$0xff]
          %v359 = vld [vmem:[#allocation6 + $0xd0] sm:$0xff]
          %v360 = vld [vmem:[#allocation6 + $0xd8] sm:$0xff]
          %v361 = vld [vmem:[#allocation6 + $0xe0] sm:$0xff]
          %v362 = vld [vmem:[#allocation6 + $0xe8] sm:$0xff]
          %v363 = vld [vmem:[#allocation6 + $0xf0] sm:$0xff]
          %v364 = vld [vmem:[#allocation6 + $0xf8] sm:$0xff]
          %v365 = vld [vmem:[#allocation6 + $0x100] sm:$0xff]
          %v366 = vld [vmem:[#allocation6 + $0x108] sm:$0xff]
          %v367 = vld [vmem:[#allocation6 + $0x110] sm:$0xff]
          %v368 = vld [vmem:[#allocation6 + $0x118] sm:$0xff]
          %v369 = vld [vmem:[#allocation6 + $0x120] sm:$0xff]
          %v370 = vld [vmem:[#allocation6 + $0x128] sm:$0xff]
          %v371 = vld [vmem:[#allocation6 + $0x130] sm:$0xff]
          %v372 = vld [vmem:[#allocation6 + $0x138] sm:$0xff]
          %v373 = vld [vmem:[#allocation6 + $0x140] sm:$0xff]
          %v374 = vld [vmem:[#allocation6 + $0x148] sm:$0xff]
          %v375 = vld [vmem:[#allocation6 + $0x150] sm:$0xff]
          %v376 = vld [vmem:[#allocation6 + $0x158] sm:$0xff]
          %v377 = vld [vmem:[#allocation6 + $0x160] sm:$0xff]
          %v378 = vld [vmem:[#allocation6 + $0x168] sm:$0xff]
          %v379 = vld [vmem:[#allocation6 + $0x170] sm:$0xff]
          %v380 = vld [vmem:[#allocation6 + $0x178] sm:$0xff]
          %v381 = vld [vmem:[#allocation6 + $0x180] sm:$0xff]
          %v382 = vld [vmem:[#allocation6 + $0x188] sm:$0xff]
          %v383 = vld [vmem:[#allocation6 + $0x190] sm:$0xff]
          %v384 = vld [vmem:[#allocation6 + $0x198] sm:$0xff]
          %v385 = vld [vmem:[#allocation6 + $0x1a0] sm:$0xff]
          %v386 = vld [vmem:[#allocation6 + $0x1a8] sm:$0xff]
          %v387 = vld [vmem:[#allocation6 + $0x1b0] sm:$0xff]
          %v388 = vld [vmem:[#allocation6 + $0x1b8] sm:$0xff]
          %v389 = vld [vmem:[#allocation6 + $0x1c0] sm:$0xff]
          %v390 = vld [vmem:[#allocation6 + $0x1c8] sm:$0xff]
          %v391 = vld [vmem:[#allocation6 + $0x1d0] sm:$0xff]
          %v392 = vld [vmem:[#allocation6 + $0x1d8] sm:$0xff]
          %v393 = vld [vmem:[#allocation6 + $0x1e0] sm:$0xff]
          %v394 = vld [vmem:[#allocation6 + $0x1e8] sm:$0xff]
          %v395 = vld [vmem:[#allocation6 + $0x1f0] sm:$0xff]
          %v396 = vld [vmem:[#allocation6 + $0x1f8] sm:$0xff]
          %v397 = vld [vmem:[#allocation6 + $0x200] sm:$0xff]
          %v398 = vld [vmem:[#allocation6 + $0x208] sm:$0xff]
          %v399 = vld [vmem:[#allocation6 + $0x210] sm:$0xff]
          %v400 = vld [vmem:[#allocation6 + $0x218] sm:$0xff]
          %v401 = vld [vmem:[#allocation6 + $0x220] sm:$0xff]
          %v402 = vld [vmem:[#allocation6 + $0x228] sm:$0xff]
          %v403 = vld [vmem:[#allocation6 + $0x230] sm:$0xff]
          %v404 = vld [vmem:[#allocation6 + $0x238] sm:$0xff]
          %v405 = vld [vmem:[#allocation6 + $0x240] sm:$0xff]
          %v406 = vld [vmem:[#allocation6 + $0x248] sm:$0xff]
          %v407 = vld [vmem:[#allocation6 + $0x250] sm:$0xff]
          %v408 = vld [vmem:[#allocation6 + $0x258] sm:$0xff]
          %v409 = vld [vmem:[#allocation6 + $0x260] sm:$0xff]
          %v410 = vld [vmem:[#allocation6 + $0x268] sm:$0xff]
          %v411 = vld [vmem:[#allocation6 + $0x270] sm:$0xff]
          %v412 = vld [vmem:[#allocation6 + $0x278] sm:$0xff]
          %v413 = vld [vmem:[#allocation6 + $0x280] sm:$0xff]
          %v414 = vld [vmem:[#allocation6 + $0x288] sm:$0xff]
          %v415 = vld [vmem:[#allocation6 + $0x290] sm:$0xff]
          %v416 = vld [vmem:[#allocation6 + $0x298] sm:$0xff]
          %v417 = vld [vmem:[#allocation6 + $0x2a0] sm:$0xff]
          %v418 = vld [vmem:[#allocation6 + $0x2a8] sm:$0xff]
          %v419 = vld [vmem:[#allocation6 + $0x2b0] sm:$0xff]
          %v420 = vld [vmem:[#allocation6 + $0x2b8] sm:$0xff]
          %v421 = vld [vmem:[#allocation6 + $0x2c0] sm:$0xff]
          %v422 = vld [vmem:[#allocation6 + $0x2c8] sm:$0xff]
          %v423 = vld [vmem:[#allocation6 + $0x2d0] sm:$0xff]
          %v424 = vld [vmem:[#allocation6 + $0x2d8] sm:$0xff]
          %v425 = vld [vmem:[#allocation6 + $0x2e0] sm:$0xff]
          %v426 = vld [vmem:[#allocation6 + $0x2e8] sm:$0xff]
          %v427 = vld [vmem:[#allocation6 + $0x2f0] sm:$0xff]
          %v428 = vld [vmem:[#allocation6 + $0x2f8] sm:$0xff]
          %v429 = vld [vmem:[#allocation8] sm:$0x3f]
          %v431 = vperm.slane %v429, 0
          %v432 = vperm.slane %v429, 1
          %v433 = vperm.slane %v429, 2
          %v434 = vperm.slane %v429, 3
          %v435 = vperm.slane %v429, 4
          %v436 = vperm.slane %v429, 5
          %443 = vmatpush.msra.mxu0 %v423
          %444 = vmatpush.msra.mxu0 %v417
          %445 = vmatpush.msra.mxu0 %v411
          %446 = vmatpush.msra.mxu0 %v405
          %447 = vmatpush.msra.mxu0 %v399
          %448 = vmatpush.msra.mxu0 %v393
          %449 = vmatpush.msra.mxu0 %v387
          %450 = vmatpush.msra.mxu0 %v381
          %451 = vmatpush.msra.mxu0 %v375
          %452 = vmatpush.msra.mxu0 %v369
          %453 = vmatpush.msra.mxu0 %v363
          %454 = vmatpush.msra.mxu0 %v357
          %455 = vmatpush.msra.mxu0 %v351
          %456 = vmatpush.msra.mxu0 %v345
          %457 = vmatpush.msra.mxu0 %v339
          %458 = vmatpush.msra.mxu0 %v333
          %459 = vmatmul.f32.gmra.mxu0 %v332
          %v460 = vpop.f32.mrf.mxu0
          %v461 = vadd.f32 %v431, %v460
          %462 = vdwg.mxu0
          %463 = vmatpush.msra.mxu0 %v424
          %464 = vmatpush.msra.mxu0 %v418
          %465 = vmatpush.msra.mxu0 %v412
          %466 = vmatpush.msra.mxu0 %v406
          %467 = vmatpush.msra.mxu0 %v400
          %468 = vmatpush.msra.mxu0 %v394
          %469 = vmatpush.msra.mxu0 %v388
          %470 = vmatpush.msra.mxu0 %v382
          %471 = vmatpush.msra.mxu0 %v376
          %472 = vmatpush.msra.mxu0 %v370
          %473 = vmatpush.msra.mxu0 %v364
          %474 = vmatpush.msra.mxu0 %v358
          %475 = vmatpush.msra.mxu0 %v352
          %476 = vmatpush.msra.mxu0 %v346
          %477 = vmatpush.msra.mxu0 %v340
          %478 = vmatpush.msra.mxu0 %v334
          %479 = vmatmul.f32.gmra.mxu0 %v332
          %v480 = vpop.f32.mrf.mxu0
          %v481 = vadd.f32 %v432, %v480
          %482 = vdwg.mxu0
          %483 = vmatpush.msra.mxu0 %v425
          %484 = vmatpush.msra.mxu0 %v419
          %485 = vmatpush.msra.mxu0 %v413
          %486 = vmatpush.msra.mxu0 %v407
          %487 = vmatpush.msra.mxu0 %v401
          %488 = vmatpush.msra.mxu0 %v395
          %489 = vmatpush.msra.mxu0 %v389
          %490 = vmatpush.msra.mxu0 %v383
          %491 = vmatpush.msra.mxu0 %v377
          %492 = vmatpush.msra.mxu0 %v371
          %493 = vmatpush.msra.mxu0 %v365
          %494 = vmatpush.msra.mxu0 %v359
          %495 = vmatpush.msra.mxu0 %v353
          %496 = vmatpush.msra.mxu0 %v347
          %497 = vmatpush.msra.mxu0 %v341
          %498 = vmatpush.msra.mxu0 %v335
          %499 = vmatmul.f32.gmra.mxu0 %v332
          %v500 = vpop.f32.mrf.mxu0
          %v501 = vadd.f32 %v433, %v500
          %502 = vdwg.mxu0
          %503 = vmatpush.msra.mxu0 %v426
          %504 = vmatpush.msra.mxu0 %v420
          %505 = vmatpush.msra.mxu0 %v414
          %506 = vmatpush.msra.mxu0 %v408
          %507 = vmatpush.msra.mxu0 %v402
          %508 = vmatpush.msra.mxu0 %v396
          %509 = vmatpush.msra.mxu0 %v390
          %510 = vmatpush.msra.mxu0 %v384
          %511 = vmatpush.msra.mxu0 %v378
          %512 = vmatpush.msra.mxu0 %v372
          %513 = vmatpush.msra.mxu0 %v366
          %514 = vmatpush.msra.mxu0 %v360
          %515 = vmatpush.msra.mxu0 %v354
          %516 = vmatpush.msra.mxu0 %v348
          %517 = vmatpush.msra.mxu0 %v342
          %518 = vmatpush.msra.mxu0 %v336
          %519 = vmatmul.f32.gmra.mxu0 %v332
          %v520 = vpop.f32.mrf.mxu0
          %v521 = vadd.f32 %v434, %v520
          %522 = vdwg.mxu0
          %523 = vmatpush.msra.mxu0 %v427
          %524 = vmatpush.msra.mxu0 %v421
          %525 = vmatpush.msra.mxu0 %v415
          %526 = vmatpush.msra.mxu0 %v409
          %527 = vmatpush.msra.mxu0 %v403
          %528 = vmatpush.msra.mxu0 %v397
          %529 = vmatpush.msra.mxu0 %v391
          %530 = vmatpush.msra.mxu0 %v385
          %531 = vmatpush.msra.mxu0 %v379
          %532 = vmatpush.msra.mxu0 %v373
          %533 = vmatpush.msra.mxu0 %v367
          %534 = vmatpush.msra.mxu0 %v361
          %535 = vmatpush.msra.mxu0 %v355
          %536 = vmatpush.msra.mxu0 %v349
          %537 = vmatpush.msra.mxu0 %v343
          %538 = vmatpush.msra.mxu0 %v337
          %539 = vmatmul.f32.gmra.mxu0 %v332
          %v540 = vpop.f32.mrf.mxu0
          %v541 = vadd.f32 %v435, %v540
          %542 = vdwg.mxu0
          %543 = vmatpush.msra.mxu0 %v428
          %544 = vmatpush.msra.mxu0 %v422
          %545 = vmatpush.msra.mxu0 %v416
          %546 = vmatpush.msra.mxu0 %v410
          %547 = vmatpush.msra.mxu0 %v404
          %548 = vmatpush.msra.mxu0 %v398
          %549 = vmatpush.msra.mxu0 %v392
          %550 = vmatpush.msra.mxu0 %v386
          %551 = vmatpush.msra.mxu0 %v380
          %552 = vmatpush.msra.mxu0 %v374
          %553 = vmatpush.msra.mxu0 %v368
          %554 = vmatpush.msra.mxu0 %v362
          %555 = vmatpush.msra.mxu0 %v356
          %556 = vmatpush.msra.mxu0 %v350
          %557 = vmatpush.msra.mxu0 %v344
          %558 = vmatpush.msra.mxu0 %v338
          %559 = vmatmul.f32.gmra.mxu0 %v332
          %v560 = vpop.f32.mrf.mxu0
          %v561 = vadd.f32 %v436, %v560
          %562 = vdwg.mxu0
          %v563 = vld [vmem:[#allocation9] sm:$0xff]
          %v564 = vld [vmem:[#allocation9 + $0x8] sm:$0xff]
          %v565 = vld [vmem:[#allocation9 + $0x10] sm:$0xff]
          %v566 = vld [vmem:[#allocation9 + $0x18] sm:$0xff]
          %v567 = vld [vmem:[#allocation9 + $0x20] sm:$0xff]
          %v568 = vld [vmem:[#allocation9 + $0x28] sm:$0xff]
          %v569 = vld [vmem:[#allocation9 + $0x30] sm:$0xff]
          %v570 = vld [vmem:[#allocation9 + $0x38] sm:$0xff]
          %v571 = vld [vmem:[#allocation9 + $0x40] sm:$0xff]
          %v572 = vld [vmem:[#allocation9 + $0x48] sm:$0xff]
          %v573 = vld [vmem:[#allocation9 + $0x50] sm:$0xff]
          %v574 = vld [vmem:[#allocation9 + $0x58] sm:$0xff]
          %v575 = vld [vmem:[#allocation9 + $0x60] sm:$0xff]
          %v576 = vld [vmem:[#allocation9 + $0x68] sm:$0xff]
          %v577 = vld [vmem:[#allocation9 + $0x70] sm:$0xff]
          %v578 = vld [vmem:[#allocation9 + $0x78] sm:$0xff]
          %v579 = vld [vmem:[#allocation9 + $0x80] sm:$0xff]
          %v580 = vld [vmem:[#allocation9 + $0x88] sm:$0xff]
          %v581 = vld [vmem:[#allocation9 + $0x90] sm:$0xff]
          %v582 = vld [vmem:[#allocation9 + $0x98] sm:$0xff]
          %v583 = vld [vmem:[#allocation9 + $0xa0] sm:$0xff]
          %v584 = vld [vmem:[#allocation9 + $0xa8] sm:$0xff]
          %v585 = vld [vmem:[#allocation9 + $0xb0] sm:$0xff]
          %v586 = vld [vmem:[#allocation9 + $0xb8] sm:$0xff]
          %v587 = vld [vmem:[#allocation9 + $0xc0] sm:$0xff]
          %v588 = vld [vmem:[#allocation9 + $0xc8] sm:$0xff]
          %v589 = vld [vmem:[#allocation9 + $0xd0] sm:$0xff]
          %v590 = vld [vmem:[#allocation9 + $0xd8] sm:$0xff]
          %v591 = vld [vmem:[#allocation9 + $0xe0] sm:$0xff]
          %v592 = vld [vmem:[#allocation9 + $0xe8] sm:$0xff]
          %v593 = vld [vmem:[#allocation9 + $0xf0] sm:$0xff]
          %v594 = vld [vmem:[#allocation9 + $0xf8] sm:$0xff]
          %v595 = vld [vmem:[#allocation9 + $0x100] sm:$0xff]
          %v596 = vld [vmem:[#allocation9 + $0x108] sm:$0xff]
          %v597 = vld [vmem:[#allocation9 + $0x110] sm:$0xff]
          %v598 = vld [vmem:[#allocation9 + $0x118] sm:$0xff]
          %v599 = vld [vmem:[#allocation9 + $0x120] sm:$0xff]
          %v600 = vld [vmem:[#allocation9 + $0x128] sm:$0xff]
          %v601 = vld [vmem:[#allocation9 + $0x130] sm:$0xff]
          %v602 = vld [vmem:[#allocation9 + $0x138] sm:$0xff]
          %v603 = vld [vmem:[#allocation9 + $0x140] sm:$0xff]
          %v604 = vld [vmem:[#allocation9 + $0x148] sm:$0xff]
          %v605 = vld [vmem:[#allocation9 + $0x150] sm:$0xff]
          %v606 = vld [vmem:[#allocation9 + $0x158] sm:$0xff]
          %v607 = vld [vmem:[#allocation9 + $0x160] sm:$0xff]
          %v608 = vld [vmem:[#allocation9 + $0x168] sm:$0xff]
          %v609 = vld [vmem:[#allocation9 + $0x170] sm:$0xff]
          %v610 = vld [vmem:[#allocation9 + $0x178] sm:$0xff]
          %v611 = vld [vmem:[#allocation9 + $0x180] sm:$0xff]
          %v612 = vld [vmem:[#allocation9 + $0x188] sm:$0xff]
          %v613 = vld [vmem:[#allocation9 + $0x190] sm:$0xff]
          %v614 = vld [vmem:[#allocation9 + $0x198] sm:$0xff]
          %v615 = vld [vmem:[#allocation9 + $0x1a0] sm:$0xff]
          %v616 = vld [vmem:[#allocation9 + $0x1a8] sm:$0xff]
          %v617 = vld [vmem:[#allocation9 + $0x1b0] sm:$0xff]
          %v618 = vld [vmem:[#allocation9 + $0x1b8] sm:$0xff]
          %v619 = vld [vmem:[#allocation9 + $0x1c0] sm:$0xff]
          %v620 = vld [vmem:[#allocation9 + $0x1c8] sm:$0xff]
          %v621 = vld [vmem:[#allocation9 + $0x1d0] sm:$0xff]
          %v622 = vld [vmem:[#allocation9 + $0x1d8] sm:$0xff]
          %v623 = vld [vmem:[#allocation9 + $0x1e0] sm:$0xff]
          %v624 = vld [vmem:[#allocation9 + $0x1e8] sm:$0xff]
          %v625 = vld [vmem:[#allocation9 + $0x1f0] sm:$0xff]
          %v626 = vld [vmem:[#allocation9 + $0x1f8] sm:$0xff]
          %v627 = vld [vmem:[#allocation9 + $0x200] sm:$0xff]
          %v628 = vld [vmem:[#allocation9 + $0x208] sm:$0xff]
          %v629 = vld [vmem:[#allocation9 + $0x210] sm:$0xff]
          %v630 = vld [vmem:[#allocation9 + $0x218] sm:$0xff]
          %v631 = vld [vmem:[#allocation9 + $0x220] sm:$0xff]
          %v632 = vld [vmem:[#allocation9 + $0x228] sm:$0xff]
          %v633 = vld [vmem:[#allocation9 + $0x230] sm:$0xff]
          %v634 = vld [vmem:[#allocation9 + $0x238] sm:$0xff]
          %v635 = vld [vmem:[#allocation9 + $0x240] sm:$0xff]
          %v636 = vld [vmem:[#allocation9 + $0x248] sm:$0xff]
          %v637 = vld [vmem:[#allocation9 + $0x250] sm:$0xff]
          %v638 = vld [vmem:[#allocation9 + $0x258] sm:$0xff]
          %v639 = vld [vmem:[#allocation9 + $0x260] sm:$0xff]
          %v640 = vld [vmem:[#allocation9 + $0x268] sm:$0xff]
          %v641 = vld [vmem:[#allocation9 + $0x270] sm:$0xff]
          %v642 = vld [vmem:[#allocation9 + $0x278] sm:$0xff]
          %v643 = vld [vmem:[#allocation9 + $0x280] sm:$0xff]
          %v644 = vld [vmem:[#allocation9 + $0x288] sm:$0xff]
          %v645 = vld [vmem:[#allocation9 + $0x290] sm:$0xff]
          %v646 = vld [vmem:[#allocation9 + $0x298] sm:$0xff]
          %v647 = vld [vmem:[#allocation9 + $0x2a0] sm:$0xff]
          %v648 = vld [vmem:[#allocation9 + $0x2a8] sm:$0xff]
          %v649 = vld [vmem:[#allocation9 + $0x2b0] sm:$0xff]
          %v650 = vld [vmem:[#allocation9 + $0x2b8] sm:$0xff]
          %v651 = vld [vmem:[#allocation9 + $0x2c0] sm:$0xff]
          %v652 = vld [vmem:[#allocation9 + $0x2c8] sm:$0xff]
          %v653 = vld [vmem:[#allocation9 + $0x2d0] sm:$0xff]
          %v654 = vld [vmem:[#allocation9 + $0x2d8] sm:$0xff]
          %v655 = vld [vmem:[#allocation9 + $0x2e0] sm:$0xff]
          %v656 = vld [vmem:[#allocation9 + $0x2e8] sm:$0xff]
          %v657 = vld [vmem:[#allocation9 + $0x2f0] sm:$0xff]
          %v658 = vld [vmem:[#allocation9 + $0x2f8] sm:$0xff]
          %v659 = vld [vmem:[%s4] sm:$0x1]
          %660 = vmatpush.msra.mxu0 %v578
          %661 = vmatpush.msra.mxu0 %v577
          %662 = vmatpush.msra.mxu0 %v576
          %663 = vmatpush.msra.mxu0 %v575
          %664 = vmatpush.msra.mxu0 %v574
          %665 = vmatpush.msra.mxu0 %v573
          %666 = vmatpush.msra.mxu0 %v572
          %667 = vmatpush.msra.mxu0 %v571
          %668 = vmatpush.msra.mxu0 %v570
          %669 = vmatpush.msra.mxu0 %v569
          %670 = vmatpush.msra.mxu0 %v568
          %671 = vmatpush.msra.mxu0 %v567
          %672 = vmatpush.msra.mxu0 %v566
          %673 = vmatpush.msra.mxu0 %v565
          %674 = vmatpush.msra.mxu0 %v564
          %675 = vmatpush.msra.mxu0 %v563
          %676 = vmatmul.f32.gmra.mxu0 %v461
          %v677 = vpop.f32.mrf.mxu0
          %v678 = vadd.f32 %v659, %v677
          %679 = vdwg.mxu0
          %680 = vmatpush.msra.mxu0 %v594
          %681 = vmatpush.msra.mxu0 %v593
          %682 = vmatpush.msra.mxu0 %v592
          %683 = vmatpush.msra.mxu0 %v591
          %684 = vmatpush.msra.mxu0 %v590
          %685 = vmatpush.msra.mxu0 %v589
          %686 = vmatpush.msra.mxu0 %v588
          %687 = vmatpush.msra.mxu0 %v587
          %688 = vmatpush.msra.mxu0 %v586
          %689 = vmatpush.msra.mxu0 %v585
          %690 = vmatpush.msra.mxu0 %v584
          %691 = vmatpush.msra.mxu0 %v583
          %692 = vmatpush.msra.mxu0 %v582
          %693 = vmatpush.msra.mxu0 %v581
          %694 = vmatpush.msra.mxu0 %v580
          %695 = vmatpush.msra.mxu0 %v579
          %696 = vmatmul.f32.gmra.mxu0 %v481
          %v697 = vpop.f32.mrf.mxu0
          %v698 = vadd.f32 %v678, %v697
          %699 = vdwg.mxu0
          %700 = vmatpush.msra.mxu0 %v610
          %701 = vmatpush.msra.mxu0 %v609
          %702 = vmatpush.msra.mxu0 %v608
          %703 = vmatpush.msra.mxu0 %v607
          %704 = vmatpush.msra.mxu0 %v606
          %705 = vmatpush.msra.mxu0 %v605
          %706 = vmatpush.msra.mxu0 %v604
          %707 = vmatpush.msra.mxu0 %v603
          %708 = vmatpush.msra.mxu0 %v602
          %709 = vmatpush.msra.mxu0 %v601
          %710 = vmatpush.msra.mxu0 %v600
          %711 = vmatpush.msra.mxu0 %v599
          %712 = vmatpush.msra.mxu0 %v598
          %713 = vmatpush.msra.mxu0 %v597
          %714 = vmatpush.msra.mxu0 %v596
          %715 = vmatpush.msra.mxu0 %v595
          %716 = vmatmul.f32.gmra.mxu0 %v501
          %v717 = vpop.f32.mrf.mxu0
          %v718 = vadd.f32 %v698, %v717
          %719 = vdwg.mxu0
          %720 = vmatpush.msra.mxu0 %v626
          %721 = vmatpush.msra.mxu0 %v625
          %722 = vmatpush.msra.mxu0 %v624
          %723 = vmatpush.msra.mxu0 %v623
          %724 = vmatpush.msra.mxu0 %v622
          %725 = vmatpush.msra.mxu0 %v621
          %726 = vmatpush.msra.mxu0 %v620
          %727 = vmatpush.msra.mxu0 %v619
          %728 = vmatpush.msra.mxu0 %v618
          %729 = vmatpush.msra.mxu0 %v617
          %730 = vmatpush.msra.mxu0 %v616
          %731 = vmatpush.msra.mxu0 %v615
          %732 = vmatpush.msra.mxu0 %v614
          %733 = vmatpush.msra.mxu0 %v613
          %734 = vmatpush.msra.mxu0 %v612
          %735 = vmatpush.msra.mxu0 %v611
          %736 = vmatmul.f32.gmra.mxu0 %v521
          %v737 = vpop.f32.mrf.mxu0
          %v738 = vadd.f32 %v718, %v737
          %739 = vdwg.mxu0
          %740 = vmatpush.msra.mxu0 %v642
          %741 = vmatpush.msra.mxu0 %v641
          %742 = vmatpush.msra.mxu0 %v640
          %743 = vmatpush.msra.mxu0 %v639
          %744 = vmatpush.msra.mxu0 %v638
          %745 = vmatpush.msra.mxu0 %v637
          %746 = vmatpush.msra.mxu0 %v636
          %747 = vmatpush.msra.mxu0 %v635
          %748 = vmatpush.msra.mxu0 %v634
          %749 = vmatpush.msra.mxu0 %v633
          %750 = vmatpush.msra.mxu0 %v632
          %751 = vmatpush.msra.mxu0 %v631
          %752 = vmatpush.msra.mxu0 %v630
          %753 = vmatpush.msra.mxu0 %v629
          %754 = vmatpush.msra.mxu0 %v628
          %755 = vmatpush.msra.mxu0 %v627
          %756 = vmatmul.f32.gmra.mxu0 %v541
          %v757 = vpop.f32.mrf.mxu0
          %v758 = vadd.f32 %v738, %v757
          %759 = vdwg.mxu0
          %760 = vmatpush.msra.mxu0 %v658
          %761 = vmatpush.msra.mxu0 %v657
          %762 = vmatpush.msra.mxu0 %v656
          %763 = vmatpush.msra.mxu0 %v655
          %764 = vmatpush.msra.mxu0 %v654
          %765 = vmatpush.msra.mxu0 %v653
          %766 = vmatpush.msra.mxu0 %v652
          %767 = vmatpush.msra.mxu0 %v651
          %768 = vmatpush.msra.mxu0 %v650
          %769 = vmatpush.msra.mxu0 %v649
          %770 = vmatpush.msra.mxu0 %v648
          %771 = vmatpush.msra.mxu0 %v647
          %772 = vmatpush.msra.mxu0 %v646
          %773 = vmatpush.msra.mxu0 %v645
          %774 = vmatpush.msra.mxu0 %v644
          %775 = vmatpush.msra.mxu0 %v643
          %776 = vmatmul.f32.gmra.mxu0 %v561
          %v777 = vpop.f32.mrf.mxu0
          %v778 = vadd.f32 %v758, %v777
          %779 = vdwg.mxu0
          %780 = vst [vmem:[%s307] sm:$0x1] %v778
        $region64: #{tpu_custom_call.1} parent=39 // pred_fallthru
          _
        %s781 = sand.u32 %s156, 1
        %s782 = scalar_lea.sflag [#allocation5], %s781
        %s783 = sand.u32 %s156, 1
        %s784 = scalar_lea.vmem [#allocation11], %s783
        // Predicated region
        $region65: #{tpu_custom_call.1} parent=39 // pred_check
          %p785 = pneg %p166
        $region66: #{tpu_custom_call.1} parent=39 // pred_check_branch
          %787 = sbr.rel (%p785) target = $region68
        $region67: #{tpu_custom_call.1} parent=39 // pred_region
          %789 = vsyncadd %s782, 0
          %s790 = scalar_lea.hbm %s5, %s28
          %s792 = sshll.u32 %s784, 4
          %s793 = int_to_ptr.vmem [resolvable:$true] %s792
          %s794 = sshll.u32 %s790, 4
          %s795 = int_to_ptr.hbm [resolvable:$true] %s794
          %797 = dma.vmem_to_hbm [thread:$0]  %s793, 16, %s795, %s782
        $region68: #{tpu_custom_call.1} parent=39 // pred_fallthru
          _
      $region40: #{tpu_custom_call.1} parent=5 // pred_fallthru
        _
      %p798 = scmp.le.s32.totalorder 2, %s19
      // Predicated region
      $region69: #{tpu_custom_call.1} parent=5 // pred_check
        %p799 = pneg %p798
      $region70: #{tpu_custom_call.1} parent=5 // pred_check_branch
        %801 = sbr.rel (%p799) target = $region72
      $region71: #{tpu_custom_call.1} parent=5 // pred_region
        %s802 = ssub.s32 %s19, 2
        // Predicated region
        $region73: #{tpu_custom_call.1} parent=71 // pred_check
          %p803 = pneg %p172
        $region74: #{tpu_custom_call.1} parent=71 // pred_check_branch
          %805 = sbr.rel (%p803) target = $region76
        $region75: #{tpu_custom_call.1} parent=71 // pred_region
          %s806 = sand.u32 %s157, 1
          %s807 = scalar_lea.sflag [#allocation5], %s806
          %s808 = sand.u32 %s157, 1
          %s809 = scalar_lea.vmem [#allocation11], %s808
          %811 = dma.done %s807, 16
        $region76: #{tpu_custom_call.1} parent=71 // pred_fallthru
          _
      $region72: #{tpu_custom_call.1} parent=5 // pred_fallthru
        _
    $region6: #{tpu_custom_call.1} parent=1 // loop_footer
      %s23 = sadd.s32 1, %s19
    $region7: #{tpu_custom_call.1} parent=1 // loop_footer_branch
      %18 = sbr.rel target = $region3
    $region8: #{tpu_custom_call.1} parent=1 // loop_exit
      _
    %812 = vsyncpa [#allocation4], 1
    %s813 = scalar_lea.sflag [#allocation4], 1
    %814 = vsyncpa %s813, 1
    %815 = vsyncpa [#allocation7], 1
    %816 = vsyncpa [#allocation10], 1
    %817 = vsyncpa [#allocation5], 1
    %s818 = scalar_lea.sflag [#allocation5], 1
    %819 = vsyncpa %s818, 1

</llo_original>
